<compile_context>
chip_gen: v7x
topology: tpu7x:2x2x1
jax: 0.10.0
libtpu: 0.0.40
codegen_flags: <defaults>
</compile_context>

<pallas_src>
import functools

import jax
import jax.numpy as jnp
from jax.experimental import pallas as pl
from jax.experimental.pallas import tpu as pltpu


_MAX_TILE_D = 8192          # lanes per D block when D must be tiled (multiple of 128)
_MAX_TILE_B = 512           # upper bound on rows per block
_MIB = 1024 * 1024


def _round_up(x, m):
    return ((x + m - 1) // m) * m


def _cdiv(a, b):
    return (a + b - 1) // b


def _vmem_capacity_bytes():
    # 128 MiB on v5e/v6e, 64 MiB per TC on v7x.  Conservative (v7x-sized)
    # fallback if the query is unavailable (e.g. interpret mode).
    try:
        return int(pltpu.get_tpu_info().vmem_capacity_bytes)
    except Exception:
        return 64 * _MIB


def _choose_tiles(n, d, pred_bytes, tgt_bytes, vmem_cap):
    # ---- D axis ------------------------------------------------------------
    # Full-extent last block dim when it fits: no column padding, no mask, and
    # (block last dim == array last dim) satisfies the (8,128) rule even when
    # D % 128 != 0.  Otherwise tile in 128-aligned chunks and mask the
    # remainder in-kernel on the last D block.
    tile_d = d if d <= _MAX_TILE_D else _MAX_TILE_D

    # ---- row axis ----------------------------------------------------------
    # Per-element VMEM footprint of one grid step:
    #   2x double-buffered input streams + ~3 tile-sized f32 temporaries
    #   (sigmoid(pred), upcast target, pred*target) inside the kernel body.
    per_elem = 2 * (pred_bytes + tgt_bytes) + 3 * 4
    budget = vmem_cap // 3                      # leave scoped-VMEM headroom
    max_rows = max(8, (budget // (per_elem * tile_d)) // 8 * 8)

    if n < 16:
        tile_b = n                              # full-extent row block (tiny batch)
    else:
        tile_b = min(_MAX_TILE_B, max_rows, _round_up(n, 8))
        # Keep >= 2 row blocks so both v7x TensorCores get work.
        if _cdiv(n, tile_b) < 2:
            tile_b = max(8, _round_up(_cdiv(n, 2), 8))

    return tile_b, tile_d


def _dice_kernel(pred_ref, target_ref, dice_ref, inter_acc, denom_acc,
                 *, true_d, tile_b, tile_d, mask_cols):
    k = pl.program_id(1)
    nk = pl.num_programs(1)

    @pl.when(k == 0)
    def _init():
        inter_acc[...] = jnp.zeros_like(inter_acc)
        denom_acc[...] = jnp.zeros_like(denom_acc)

    # Upcast before sigmoid / accumulation (inputs may be bf16 streams).
    p = jax.nn.sigmoid(pred_ref[...].astype(jnp.float32))
    t = target_ref[...].astype(jnp.float32)

    def _accumulate(p_blk, t_blk):
        inter_acc[...] += jnp.sum(p_blk * t_blk, axis=1, keepdims=True)
        # pred-sum + target-sum fused into a single denominator accumulator.
        denom_acc[...] += jnp.sum(p_blk + t_blk, axis=1, keepdims=True)

    if mask_cols:
        # Only the last D block contains out-of-range columns; interior blocks
        # take the mask-free path (no iota / compare / select work).
        @pl.when(k < nk - 1)
        def _interior():
            _accumulate(p, t)

        @pl.when(k == nk - 1)
        def _remainder():
            col = k * tile_d + jax.lax.broadcasted_iota(
                jnp.int32, (tile_b, tile_d), 1)
            valid = col < true_d
            # Inputs are NOT padded in HBM, so out-of-range columns hold
            # undefined data: both operands must be masked here.
            _accumulate(jnp.where(valid, p, 0.0), jnp.where(valid, t, 0.0))
    else:
        _accumulate(p, t)

    @pl.when(k == nk - 1)
    def _finalize():
        smooth = jnp.float32(1.0)
        dice_ref[...] = (2.0 * inter_acc[...] + smooth) / (denom_acc[...] + smooth)


def binary_dice_loss(pred, target, *, low_precision_inputs=False, target_bf16=True):
    """Pallas TPU implementation of BinaryDiceLoss.forward(pred, target).

    low_precision_inputs=True streams `pred` to the kernel as bf16 (halves its
    HBM traffic; mildly approximate since sigmoid sees bf16-rounded logits).
    target_bf16=True streams `target` as bf16, which is lossless for {0, 1}
    masks.  Accumulation is always f32 inside the kernel.
    """
    n = pred.shape[0]
    pred_flat = pred.reshape(n, -1)
    target_flat = target.reshape(n, -1)
    d = pred_flat.shape[1]

    if low_precision_inputs:
        pred_flat = pred_flat.astype(jnp.bfloat16)
    if target_bf16:
        # NOTE: inside a larger jit this cast fuses with the target's producer;
        # standalone it is one small extra pass but halves the kernel's target
        # read traffic.
        target_flat = target_flat.astype(jnp.bfloat16)

    vmem_cap = _vmem_capacity_bytes()
    tile_b, tile_d = _choose_tiles(
        n, d, pred_flat.dtype.itemsize, target_flat.dtype.itemsize, vmem_cap)

    grid = (_cdiv(n, tile_b), _cdiv(d, tile_d))
    mask_cols = (grid[1] * tile_d) != d

    kernel = functools.partial(
        _dice_kernel, true_d=d, tile_b=tile_b, tile_d=tile_d, mask_cols=mask_cols)

    # Scoped-VMEM limit: enough for the double-buffered streams + f32
    # temporaries budgeted in _choose_tiles, yet safely below physical capacity
    # on every generation (64 MiB on v7x, 128 MiB on v5e/v6e).
    vmem_limit = int(min(vmem_cap - 16 * _MIB, vmem_cap // 3 + 24 * _MIB))
    vmem_limit = max(vmem_limit, 32 * _MIB)

    dice = pl.pallas_call(
        kernel,
        out_shape=jax.ShapeDtypeStruct((n, 1), jnp.float32),
        grid_spec=pltpu.PrefetchScalarGridSpec(
            num_scalar_prefetch=0,
            grid=grid,
            in_specs=[
                pl.BlockSpec((tile_b, tile_d), lambda i, k: (i, k)),
                pl.BlockSpec((tile_b, tile_d), lambda i, k: (i, k)),
            ],
            out_specs=pl.BlockSpec((tile_b, 1), lambda i, k: (i, 0)),
            scratch_shapes=[
                pltpu.VMEM((tile_b, 1), jnp.float32),  # intersection partial sums
                pltpu.VMEM((tile_b, 1), jnp.float32),  # pred-sum + target-sum
            ],
        ),
        compiler_params=pltpu.CompilerParams(
            dimension_semantics=("parallel", "arbitrary"),
            vmem_limit_bytes=vmem_limit,
        ),
    )(pred_flat, target_flat)

    # Tiny final reduction stays in XLA (N scalars).
    return 1.0 - jnp.sum(dice[:, 0]) / n


def _reference(pred, target):
    # Pure-JAX reference mirroring the PyTorch module exactly (f32).
    p = jax.nn.sigmoid(pred.astype(jnp.float32))
    n = target.shape[0]
    smooth = 1.0
    pf = p.reshape(n, -1)
    tf = target.astype(jnp.float32).reshape(n, -1)
    inter = (pf * tf).sum(1)
    dice = (2 * inter + smooth) / (pf.sum(1) + tf.sum(1) + smooth)
    return 1.0 - dice.sum() / n


if __name__ == "__main__":
    key = jax.random.PRNGKey(0)
    k1, k2, k3, k4, k5, k6 = jax.random.split(key, 6)

    # 1) Binary segmentation head, NCHW = (2, 4, 16, 16): single-block path.
    pred = jax.random.normal(k1, (2, 4, 16, 16), dtype=jnp.float32)
    target = (jax.random.uniform(k2, (2, 4, 16, 16)) > 0.5).astype(jnp.float32)
    loss = jax.block_until_ready(binary_dice_loss(pred, target))
    ref = _reference(pred, target)
    assert jnp.allclose(loss, ref, atol=1e-5, rtol=1e-5), (loss, ref)

    # 2) Bandwidth-optimized path: bf16 pred stream (approximate, opt-in).
    loss_bf16 = jax.block_until_ready(
        binary_dice_loss(pred, target, low_precision_inputs=True))
    assert jnp.allclose(loss_bf16, ref, atol=5e-3, rtol=5e-3), (loss_bf16, ref)

    # 3) Odd shape (N=3, D=390): full-extent blocks, no padding anywhere.
    pred_odd = jax.random.normal(k3, (3, 3, 10, 13), dtype=jnp.float32)
    target_odd = (jax.random.uniform(k4, (3, 3, 10, 13)) > 0.5).astype(jnp.float32)
    loss_odd = jax.block_until_ready(binary_dice_loss(pred_odd, target_odd))
    ref_odd = _reference(pred_odd, target_odd)
    assert jnp.allclose(loss_odd, ref_odd, atol=1e-5, rtol=1e-5), (loss_odd, ref_odd)

    # 4) Multi-block path: 2 row blocks (last one partial) + tiled D with a
    #    masked remainder block (D = 10800 > 8192).
    pred_big = jax.random.normal(k5, (24, 3, 60, 60), dtype=jnp.float32)
    target_big = (jax.random.uniform(k6, (24, 3, 60, 60)) > 0.5).astype(jnp.float32)
    loss_big = jax.block_until_ready(binary_dice_loss(pred_big, target_big))
    ref_big = _reference(pred_big, target_big)
    assert jnp.allclose(loss_big, ref_big, atol=1e-4, rtol=1e-4), (loss_big, ref_big)

    print("KERNEL_OK")
</pallas_src>

<mosaic_0001>
module attributes {stable_mosaic.version = 11 : i64} {
  func.func @_dice_kernel(%arg0: i32, %arg1: i32, %arg2: memref<2x1024xf32, #tpu.memory_space<vmem>>, %arg3: memref<2x1024xbf16, #tpu.memory_space<vmem>>, %arg4: memref<2x1xf32, #tpu.memory_space<vmem>>, %arg5: memref<2x1xf32, #tpu.memory_space<vmem>>, %arg6: memref<2x1xf32, #tpu.memory_space<vmem>>) attributes {dimension_semantics = [#tpu.dimension_semantics<parallel>, #tpu.dimension_semantics<arbitrary>], iteration_bounds = array<i64: 1, 1>, scalar_prefetch = 0 : i64, scratch_operands = 2 : i64, tpu.core_type = #tpu.core_type<tc>, window_params = [{transform_indices = @transform_0, window_bounds = array<i64: 2, 1024>}, {transform_indices = @transform_1, window_bounds = array<i64: 2, 1024>}, {transform_indices = @transform_2, window_bounds = array<i64: 2, 1>}]} {
    %c0_i32 = arith.constant 0 : i32
    %0 = arith.cmpi eq, %arg1, %c0_i32 : i32
    %1 = arith.extui %0 : i1 to i32
    %c0_i32_0 = arith.constant 0 : i32
    %2 = arith.cmpi ne, %1, %c0_i32_0 : i32
    scf.if %2 {
      %cst_16 = arith.constant 0.000000e+00 : f32
      %26 = vector.broadcast %cst_16 : f32 to vector<2x1xf32>
      %c0_17 = arith.constant 0 : index
      %c0_18 = arith.constant 0 : index
      %27 = vector.load %arg5[%c0_17, %c0_18] : memref<2x1xf32, #tpu.memory_space<vmem>>, vector<2x1xf32>
      tpu.vector_store %arg5[%c0_17, %c0_18], %26 {strides = array<i32>} : memref<2x1xf32, #tpu.memory_space<vmem>>, vector<2x1xf32>,
      %cst_19 = arith.constant 0.000000e+00 : f32
      %28 = vector.broadcast %cst_19 : f32 to vector<2x1xf32>
      %c0_20 = arith.constant 0 : index
      %c0_21 = arith.constant 0 : index
      %29 = vector.load %arg6[%c0_20, %c0_21] : memref<2x1xf32, #tpu.memory_space<vmem>>, vector<2x1xf32>
      tpu.vector_store %arg6[%c0_20, %c0_21], %28 {strides = array<i32>} : memref<2x1xf32, #tpu.memory_space<vmem>>, vector<2x1xf32>,
    } else {
    }
    %c0 = arith.constant 0 : index
    %c0_1 = arith.constant 0 : index
    %3 = vector.load %arg2[%c0, %c0_1] : memref<2x1024xf32, #tpu.memory_space<vmem>>, vector<2x1024xf32>
    %4 = arith.negf %3 : vector<2x1024xf32>
    %5 = math.exp %4 : vector<2x1024xf32>
    %cst = arith.constant 1.000000e+00 : f32
    %6 = vector.broadcast %cst : f32 to vector<2x1024xf32>
    %7 = arith.addf %6, %5 : vector<2x1024xf32>
    %8 = arith.divf %6, %7 : vector<2x1024xf32>
    %c0_2 = arith.constant 0 : index
    %c0_3 = arith.constant 0 : index
    %9 = vector.load %arg3[%c0_2, %c0_3] : memref<2x1024xbf16, #tpu.memory_space<vmem>>, vector<2x1024xbf16>
    %10 = arith.extf %9 : vector<2x1024xbf16> to vector<2x1024xf32>
    %c0_4 = arith.constant 0 : index
    %c0_5 = arith.constant 0 : index
    %11 = vector.load %arg5[%c0_4, %c0_5] : memref<2x1xf32, #tpu.memory_space<vmem>>, vector<2x1xf32>
    %12 = arith.mulf %8, %10 : vector<2x1024xf32>
    %cst_6 = arith.constant dense<0.000000e+00> : vector<2xf32>
    %13 = vector.multi_reduction <add>, %12, %cst_6 [1] : vector<2x1024xf32> to vector<2xf32>
    %14 = vector.shape_cast %13 : vector<2xf32> to vector<2x1xf32>
    %15 = arith.addf %11, %14 : vector<2x1xf32>
    %c0_7 = arith.constant 0 : index
    %c0_8 = arith.constant 0 : index
    %16 = vector.load %arg5[%c0_7, %c0_8] : memref<2x1xf32, #tpu.memory_space<vmem>>, vector<2x1xf32>
    tpu.vector_store %arg5[%c0_7, %c0_8], %15 {strides = array<i32>} : memref<2x1xf32, #tpu.memory_space<vmem>>, vector<2x1xf32>,
    %c0_9 = arith.constant 0 : index
    %c0_10 = arith.constant 0 : index
    %17 = vector.load %arg6[%c0_9, %c0_10] : memref<2x1xf32, #tpu.memory_space<vmem>>, vector<2x1xf32>
    %18 = arith.addf %8, %10 : vector<2x1024xf32>
    %cst_11 = arith.constant dense<0.000000e+00> : vector<2xf32>
    %19 = vector.multi_reduction <add>, %18, %cst_11 [1] : vector<2x1024xf32> to vector<2xf32>
    %20 = vector.shape_cast %19 : vector<2xf32> to vector<2x1xf32>
    %21 = arith.addf %17, %20 : vector<2x1xf32>
    %c0_12 = arith.constant 0 : index
    %c0_13 = arith.constant 0 : index
    %22 = vector.load %arg6[%c0_12, %c0_13] : memref<2x1xf32, #tpu.memory_space<vmem>>, vector<2x1xf32>
    tpu.vector_store %arg6[%c0_12, %c0_13], %21 {strides = array<i32>} : memref<2x1xf32, #tpu.memory_space<vmem>>, vector<2x1xf32>,
    %c0_i32_14 = arith.constant 0 : i32
    %23 = arith.cmpi eq, %arg1, %c0_i32_14 : i32
    %24 = arith.extui %23 : i1 to i32
    %c0_i32_15 = arith.constant 0 : i32
    %25 = arith.cmpi ne, %24, %c0_i32_15 : i32
    scf.if %25 {
      %c0_16 = arith.constant 0 : index
      %c0_17 = arith.constant 0 : index
      %26 = vector.load %arg5[%c0_16, %c0_17] : memref<2x1xf32, #tpu.memory_space<vmem>>, vector<2x1xf32>
      %cst_18 = arith.constant 2.000000e+00 : f32
      %27 = vector.broadcast %cst_18 : f32 to vector<2x1xf32>
      %28 = arith.mulf %27, %26 : vector<2x1xf32>
      %cst_19 = arith.constant 1.000000e+00 : f32
      %29 = vector.broadcast %cst_19 : f32 to vector<2x1xf32>
      %30 = arith.addf %28, %29 : vector<2x1xf32>
      %c0_20 = arith.constant 0 : index
      %c0_21 = arith.constant 0 : index
      %31 = vector.load %arg6[%c0_20, %c0_21] : memref<2x1xf32, #tpu.memory_space<vmem>>, vector<2x1xf32>
      %cst_22 = arith.constant 1.000000e+00 : f32
      %32 = vector.broadcast %cst_22 : f32 to vector<2x1xf32>
      %33 = arith.addf %31, %32 : vector<2x1xf32>
      %34 = arith.divf %30, %33 : vector<2x1xf32>
      %c0_23 = arith.constant 0 : index
      %c0_24 = arith.constant 0 : index
      %35 = vector.load %arg4[%c0_23, %c0_24] : memref<2x1xf32, #tpu.memory_space<vmem>>, vector<2x1xf32>
      tpu.vector_store %arg4[%c0_23, %c0_24], %34 {strides = array<i32>} : memref<2x1xf32, #tpu.memory_space<vmem>>, vector<2x1xf32>,
    } else {
    }
    return
  }
  func.func @transform_0(%arg0: i32, %arg1: i32) -> (i32, i32) {
    %c0_i32 = arith.constant 0 : i32
    return %arg0, %arg1 : i32, i32
  }
  func.func @transform_1(%arg0: i32, %arg1: i32) -> (i32, i32) {
    %c0_i32 = arith.constant 0 : i32
    return %arg0, %arg1 : i32, i32
  }
  func.func @transform_2(%arg0: i32, %arg1: i32) -> (i32, i32) {
    %c0_i32 = arith.constant 0 : i32
    %c0_i32_0 = arith.constant 0 : i32
    return %arg0, %c0_i32 : i32, i32
  }
}

</mosaic_0001>

<llo_original>
// kernel: tpu_custom_call.1
$region0: #{tpu_custom_call.1}
  #allocation0 [shape = 'u32[]', space=smem, size = 0x4, offset = 0x4, fixed_abs, tag = 'smem constant byte address 0x4 - core index']
  #allocation1 [shape = 'u32[144,128]{1,0:T(1,128)}', space=vmem, size = 0x12000, scoped, tag = 'internal scratch']
  #allocation2 [shape = 'f32[2,1]{1,0:T(2,128)}', space=vmem, size = 0x400, scoped, tag = 'scratch operand']
  #allocation3 [shape = 'f32[2,1]{1,0:T(2,128)}', space=vmem, size = 0x400, scoped, tag = 'scratch operand']
  %s0 = inlined_call_operand.hbm [shape: f32[2,1024], index: 0, kind: input, shape index: {}]
  %s1 = inlined_call_operand.hbm [shape: bf16[2,1024], index: 1, kind: input, shape index: {}]
  %s2 = inlined_call_operand.vmem [shape: f32[2,1], index: 2, kind: output, shape index: {}]
  %s3 = sld [smem:[#allocation0]]
  $region34: #{tpu_custom_call.1} parent=0
    _
  %s5 = ssub.s32 1, %s3
  %s6 = scalar_select 0, %s5, %s3
  $region1: #{tpu_custom_call.1} parent=0
    #allocation4 [shape = 'u8[8192]{0}', space=vmem, size = 0x2000, scoped, tag = 'input window, operand 0, single buffered']
    #allocation5 [shape = 's32[1]{0}', space=sflag, size = 0x4, scoped, tag = 'scoped memory for tpu_custom_call.1']
    #allocation6 [shape = 'u8[4096]{0}', space=vmem, size = 0x1000, scoped, tag = 'input window, operand 1, single buffered']
    #allocation7 [shape = 's32[1]{0}', space=sflag, size = 0x4, scoped, tag = 'scoped memory for tpu_custom_call.1']
    %7 = vsyncpa [#allocation5], 0
    %8 = vsyncpa [#allocation7], 0
    // Predicated region
    $region2: #{tpu_custom_call.1} parent=1 // pred_check
      _
    $region3: #{tpu_custom_call.1} parent=1 // pred_check_branch
      %10 = sbr.rel (0) target = $region5
    $region4: #{tpu_custom_call.1} parent=1 // pred_region
      %s12 = ssub.s32 256, 256
      %13 = vsyncadd [#allocation5], %s12
      %s15 = sshll.u32 [#allocation4], 4
      %s16 = int_to_ptr.vmem [resolvable:$true] %s15
      %18 = dma.hbm_to_vmem [thread:$0]  %s0, 256, %s16, [#allocation5]
    $region5: #{tpu_custom_call.1} parent=1 // pred_fallthru
      _
    // Predicated region
    $region6: #{tpu_custom_call.1} parent=1 // pred_check
      _
    $region7: #{tpu_custom_call.1} parent=1 // pred_check_branch
      %20 = sbr.rel (0) target = $region9
    $region8: #{tpu_custom_call.1} parent=1 // pred_region
      %s22 = ssub.s32 128, 128
      %23 = vsyncadd [#allocation7], %s22
      %s25 = sshll.u32 [#allocation6], 4
      %s26 = int_to_ptr.vmem [resolvable:$true] %s25
      %28 = dma.hbm_to_vmem [thread:$0]  %s1, 128, %s26, [#allocation7]
    $region9: #{tpu_custom_call.1} parent=1 // pred_fallthru
      _
    // Predicated region
    $region10: #{tpu_custom_call.1} parent=1 // pred_check
      _
    $region11: #{tpu_custom_call.1} parent=1 // pred_check_branch
      %30 = sbr.rel (0) target = $region13
    $region12: #{tpu_custom_call.1} parent=1 // pred_region
      %31 = dma.done [#allocation5], 256
    $region13: #{tpu_custom_call.1} parent=1 // pred_fallthru
      _
    // Predicated region
    $region14: #{tpu_custom_call.1} parent=1 // pred_check
      _
    $region15: #{tpu_custom_call.1} parent=1 // pred_check_branch
      %33 = sbr.rel (0) target = $region17
    $region16: #{tpu_custom_call.1} parent=1 // pred_region
      %34 = dma.done [#allocation7], 128
    $region17: #{tpu_custom_call.1} parent=1 // pred_fallthru
      _
    %p35 = scmp.eq.s32.totalorder 0, 0
    // Predicated region
    $region18: #{tpu_custom_call.1} parent=1 // pred_check
      %p36 = pneg %p35
    $region19: #{tpu_custom_call.1} parent=1 // pred_check_branch
      %38 = sbr.rel (%p36) target = $region21
    $region20: #{tpu_custom_call.1} parent=1 // pred_region
      %vm39 = vcmask 1024
      %40 = vst.msk [vmem:[#allocation2] sm:$0x3] %vm39, 0.0
      %41 = vst.msk [vmem:[#allocation3] sm:$0x3] %vm39, 0.0
    $region21: #{tpu_custom_call.1} parent=1 // pred_fallthru
      _
    %v42 = vld [vmem:[#allocation4] sm:$0xff]
    %v43 = vld [vmem:[#allocation4 + $0x8] sm:$0xff]
    %v44 = vxor.u32 %v42, 2147483648
    %v45 = vxor.u32 %v43, 2147483648
    %v46 = vmul.f32 %v44, 1.442695
    %v47 = vpow.pop %v46
    %v48 = vmul.f32 %v45, 1.442695
    %v49 = vpow.pop %v48
    %v50 = vadd.f32 %v47, 1.0
    %v51 = vadd.f32 %v49, 1.0
    %v52 = vrcp.pop %v50
    %v53 = vmul.f32 1.0, %v52
    %v54 = vrcp.pop %v51
    %v55 = vmul.f32 1.0, %v54
    %v56 = vld [vmem:[#allocation6] sm:$0xff]
    %v57 = vunpack.c.l.bf16 %v56
    %v58 = vunpack.c.h.bf16 %v56
    %v59 = vld [vmem:[#allocation2] sm:$0x3]
    %v60 = vmul.f32 %v53, %v57
    %v61 = vmul.f32 %v55, %v58
    %v64 = vcombine.high %v60, %v60
    %v66 = vunpack.c.l.s4 1983009808
    %v67 = vunpack.c.0.s8 %v66
    %v68 = vlaneseq
    %v69 = vshrl.u32 %v68, 7
    %v70 = vsub.s32 %v67, %v69
    %v71 = vrot.slane %v60, %v70
    %v73 = vunpack.c.l.s4 1983009808
    %v74 = vunpack.c.0.s8 %v73
    %v75 = vlaneseq
    %v76 = vshrl.u32 %v75, 7
    %v77 = vsub.s32 %v74, %v76
    %v78 = vrot.slane %v64, %v77
    %v79 = vcombine.high %v71, %v71
    %v80 = vcombine.high %v78, %v78
    %v81 = vcombine.high %v61, %v61
    %v83 = vunpack.c.l.s4 1983009808
    %v84 = vunpack.c.0.s8 %v83
    %v85 = vlaneseq
    %v86 = vshrl.u32 %v85, 7
    %v87 = vsub.s32 %v84, %v86
    %v88 = vrot.slane %v61, %v87
    %v90 = vunpack.c.l.s4 1983009808
    %v91 = vunpack.c.0.s8 %v90
    %v92 = vlaneseq
    %v93 = vshrl.u32 %v92, 7
    %v94 = vsub.s32 %v91, %v93
    %v95 = vrot.slane %v81, %v94
    %v96 = vcombine.high %v88, %v88
    %v97 = vcombine.high %v95, %v95
    %vm106 = vcmask 1041408
    %v107 = vsel %vm106, %v71, 0.0
    %v108 = vsel %vm106, %v79, 0.0
    %v109 = vadd.f32 %v107, %v108
    %v110 = vsel %vm106, %v78, 0.0
    %v111 = vadd.f32 %v109, %v110
    %v112 = vsel %vm106, %v80, 0.0
    %v113 = vadd.f32 %v111, %v112
    %v114 = vsel %vm106, %v88, 0.0
    %v115 = vadd.f32 %v113, %v114
    %v116 = vsel %vm106, %v96, 0.0
    %v117 = vadd.f32 %v115, %v116
    %v118 = vsel %vm106, %v95, 0.0
    %v119 = vadd.f32 %v117, %v118
    %v120 = vsel %vm106, %v97, 0.0
    %v121 = vadd.f32 %v119, %v120
    %122 = vadd.xlane.f32.xlu0 %v121
    %v123 = vpop.xlane.xlu0 %122
    %v124 = vadd.f32 %v59, %v123
    %vm125 = vcmask 1024
    %126 = vst.msk [vmem:[#allocation2] sm:$0x3] %vm125, %v124
    %v127 = vld [vmem:[#allocation3] sm:$0x3]
    %v128 = vadd.f32 %v53, %v57
    %v129 = vadd.f32 %v55, %v58
    %v132 = vcombine.high %v128, %v128
    %v134 = vunpack.c.l.s4 1983009808
    %v135 = vunpack.c.0.s8 %v134
    %v136 = vlaneseq
    %v137 = vshrl.u32 %v136, 7
    %v138 = vsub.s32 %v135, %v137
    %v139 = vrot.slane %v128, %v138
    %v141 = vunpack.c.l.s4 1983009808
    %v142 = vunpack.c.0.s8 %v141
    %v143 = vlaneseq
    %v144 = vshrl.u32 %v143, 7
    %v145 = vsub.s32 %v142, %v144
    %v146 = vrot.slane %v132, %v145
    %v147 = vcombine.high %v139, %v139
    %v148 = vcombine.high %v146, %v146
    %v149 = vcombine.high %v129, %v129
    %v151 = vunpack.c.l.s4 1983009808
    %v152 = vunpack.c.0.s8 %v151
    %v153 = vlaneseq
    %v154 = vshrl.u32 %v153, 7
    %v155 = vsub.s32 %v152, %v154
    %v156 = vrot.slane %v129, %v155
    %v158 = vunpack.c.l.s4 1983009808
    %v159 = vunpack.c.0.s8 %v158
    %v160 = vlaneseq
    %v161 = vshrl.u32 %v160, 7
    %v162 = vsub.s32 %v159, %v161
    %v163 = vrot.slane %v149, %v162
    %v164 = vcombine.high %v156, %v156
    %v165 = vcombine.high %v163, %v163
    %v174 = vsel %vm106, %v139, 0.0
    %v175 = vsel %vm106, %v147, 0.0
    %v176 = vadd.f32 %v174, %v175
    %v177 = vsel %vm106, %v146, 0.0
    %v178 = vadd.f32 %v176, %v177
    %v179 = vsel %vm106, %v148, 0.0
    %v180 = vadd.f32 %v178, %v179
    %v181 = vsel %vm106, %v156, 0.0
    %v182 = vadd.f32 %v180, %v181
    %v183 = vsel %vm106, %v164, 0.0
    %v184 = vadd.f32 %v182, %v183
    %v185 = vsel %vm106, %v163, 0.0
    %v186 = vadd.f32 %v184, %v185
    %v187 = vsel %vm106, %v165, 0.0
    %v188 = vadd.f32 %v186, %v187
    %189 = vadd.xlane.f32.xlu0 %v188
    %v190 = vpop.xlane.xlu0 %189
    %v191 = vadd.f32 %v127, %v190
    %192 = vst.msk [vmem:[#allocation3] sm:$0x3] %vm125, %v191
    // Predicated region
    $region22: #{tpu_custom_call.1} parent=1 // pred_check
      %p193 = pneg %p35
    $region23: #{tpu_custom_call.1} parent=1 // pred_check_branch
      %195 = sbr.rel (%p193) target = $region25
    $region24: #{tpu_custom_call.1} parent=1 // pred_region
      %v196 = vld [vmem:[#allocation2] sm:$0x3]
      %v197 = vmul.f32 %v196, 2.0
      %v198 = vadd.f32 %v197, 1.0
      %v199 = vld [vmem:[#allocation3] sm:$0x3]
      %v200 = vadd.f32 %v199, 1.0
      %v201 = vrcp.pop %v200
      %v202 = vmul.f32 %v198, %v201
      %203 = vst.msk [vmem:[%s2] sm:$0x3] %vm125, %v202
    $region25: #{tpu_custom_call.1} parent=1 // pred_fallthru
      _
    // Predicated region
    $region26: #{tpu_custom_call.1} parent=1 // pred_check
      _
    $region27: #{tpu_custom_call.1} parent=1 // pred_check_branch
      %205 = sbr.rel (0) target = $region29
    $region28: #{tpu_custom_call.1} parent=1 // pred_region
      _
    $region29: #{tpu_custom_call.1} parent=1 // pred_fallthru
      _
    // Predicated region
    $region30: #{tpu_custom_call.1} parent=1 // pred_check
      _
    $region31: #{tpu_custom_call.1} parent=1 // pred_check_branch
      %207 = sbr.rel (0) target = $region33
    $region32: #{tpu_custom_call.1} parent=1 // pred_region
      _
    $region33: #{tpu_custom_call.1} parent=1 // pred_fallthru
      _
    %208 = vsyncpa [#allocation5], 1
    %209 = vsyncpa [#allocation7], 1

</llo_original>
